<compile_context>
chip_gen: v6e
topology: v6e:2x2x1
jax: 0.10.0
libtpu: 0.0.40
codegen_flags: <defaults>
</compile_context>

<pallas_src>
import math

import jax
import jax.numpy as jnp
from jax.experimental import pallas as pl
from jax.experimental.pallas import tpu as pltpu

# ---- small, module-consistent sizes ----
B = 2            # batch
S = 8            # sequence length
E = 32           # config.d_embed (per-head dim == embed dim in this module)
H = 2            # config.n_heads
HE = H * E       # 64
HIDDEN = 4 * E   # MLP hidden = 128
EPS = 1e-5
NEG_INF = -1e30
E2 = E // 2
BS = B * S       # 16 rows of activations
HBS = H * B * S  # 32 rows after head stacking

# ---- slab A (33, 320): fused QKV(+rotated) projection + its bias row ----
A_W, A_B = 0, E                       # rows 0..31 weight, row 32 bias
QK_LO, QK_HI = 0, 4 * E               # lanes: [ q h0 | q h1 | k h0 | k h1 ]
ROT_LO, ROT_HI = 4 * E, 8 * E         # rotate-half(+sign) of the above (pre-folded)
V_LO, V_HI = 8 * E, 10 * E            # lanes: [ v h0 | v h1 ]

# ---- slab B (65, 128): MLP fc1 (LN2 folded) + RoPE tables + fc1 bias ----
B_W1, B_COS, B_SIN, B_B1 = 0, E, E + BS, E + 2 * BS          # 0, 32, 48, 64

# ---- slab C (225, 32): W_o (per head) + fc2 + block-diag mask + fc2 bias ----
C_WO0, C_WO1, C_W2 = 0, E, 2 * E
C_MASK = 2 * E + HIDDEN                                       # 192
C_B2 = C_MASK + HBS                                           # 224


def block_kernel(x_ref, a_ref, b_ref, c_ref, out_ref):
    def norm(t):
        # single-pass LN statistics: two independent cross-lane reductions
        # (can dual-issue on the XLUs) instead of reduce -> sub -> reduce.
        s1 = jnp.sum(t, axis=-1, keepdims=True)
        s2 = jnp.sum(t * t, axis=-1, keepdims=True)
        mu = s1 * (1.0 / E)
        var = s2 * (1.0 / E) - mu * mu
        return (t - mu) * jax.lax.rsqrt(var + EPS)

    x = x_ref[...]                                             # (16, 32)

    # ---------------- attention branch ----------------
    xn = norm(x)
    # ONE (16,32)@(32,320) projection producing q|k, their pre-rotated copies,
    # and v.  LN1 gamma/beta and the 1/sqrt(E) attention scale are folded in.
    qkv = (jnp.dot(xn, a_ref[A_W:A_W + E, :],
                   preferred_element_type=jnp.float32)
           + a_ref[A_B:A_B + 1, :])                            # (16, 320)

    # RoPE for q and k of both heads/batches in three full-width VPU ops:
    # rotate-half (with its sign) lives in the ROT weight columns, so there is
    # no in-kernel roll / slice-concat feeding the QK matmul.
    qk = (qkv[:, QK_LO:QK_HI] * b_ref[B_COS:B_COS + BS, :]
          + qkv[:, ROT_LO:ROT_HI] * b_ref[B_SIN:B_SIN + BS, :])  # (16, 128)
    vv = qkv[:, V_LO:V_HI]                                       # (16, 64)

    # stack heads along rows -> (H*B*S, E) = (32, 32); row = h*B*S + b*S + s
    q_all = jnp.concatenate([qk[:, 0:E], qk[:, E:2 * E]], axis=0)
    k_all = jnp.concatenate([qk[:, 2 * E:3 * E], qk[:, 3 * E:4 * E]], axis=0)
    v_all = jnp.concatenate([vv[:, 0:E], vv[:, E:2 * E]], axis=0)

    # all (head, batch) score blocks in ONE 32x32x32 MXU pass; cross-block
    # entries are killed by the block-diagonal additive mask, so softmax over
    # the full 32 key columns equals the per-block softmax exactly.
    scores = jax.lax.dot_general(q_all, k_all, (((1,), (1,)), ((), ())),
                                 preferred_element_type=jnp.float32)
    scores = scores + c_ref[C_MASK:C_MASK + HBS, :]
    scores = scores - jnp.max(scores, axis=-1, keepdims=True)
    p = jnp.exp(scores)
    p = p / jnp.sum(p, axis=-1, keepdims=True)     # exact divide (tight parity)
    o = jnp.dot(p, v_all, preferred_element_type=jnp.float32)   # (32, 32)

    # output projection without a lane concat of heads: per-head matmul + add.
    attn = (jnp.dot(o[0:BS, :], c_ref[C_WO0:C_WO0 + E, :],
                    preferred_element_type=jnp.float32)
            + jnp.dot(o[BS:2 * BS, :], c_ref[C_WO1:C_WO1 + E, :],
                      preferred_element_type=jnp.float32))
    x = x + attn

    # ---------------- MLP branch ----------------
    xn2 = norm(x)
    h = (jnp.dot(xn2, b_ref[B_W1:B_W1 + E, :],
                 preferred_element_type=jnp.float32)
         + b_ref[B_B1:B_B1 + 1, :])
    h = jax.nn.gelu(h, approximate=True)
    m = (jnp.dot(h, c_ref[C_W2:C_W2 + HIDDEN, :],
                 preferred_element_type=jnp.float32)
         + c_ref[C_B2:C_B2 + 1, :])

    out_ref[...] = x + m


def alt_transformer_block(x, p):
    x2 = x.reshape(B * S, E)                      # fold batch into rows (wrapper side)
    vmem = pl.BlockSpec(memory_space=pltpu.MemorySpace.VMEM)
    out = pl.pallas_call(
        block_kernel,
        out_shape=jax.ShapeDtypeStruct((B * S, E), jnp.float32),
        in_specs=[vmem, vmem, vmem, vmem],
        out_specs=vmem,
    )(x2, p["slab_a"], p["slab_b"], p["slab_c"])
    return out.reshape(B, S, E)


# --------------- pure-JAX reference (mirrors the torch forward) ---------------
def reference(x, p):
    def ln(t, g, b):
        mu = t.mean(-1, keepdims=True)
        var = ((t - mu) ** 2).mean(-1, keepdims=True)
        return (t - mu) / jnp.sqrt(var + EPS) * g + b

    h = ln(x, p["ln1_g"], p["ln1_b"])
    q = (h @ p["wq_full"]).reshape(B, S, H, E).transpose(0, 2, 1, 3)
    k = (h @ p["wk_full"]).reshape(B, S, H, E).transpose(0, 2, 1, 3)
    v = (h @ p["wv_full"]).reshape(B, S, H, E).transpose(0, 2, 1, 3)

    def rope(t):
        rot = jnp.concatenate([-t[..., E2:], t[..., :E2]], axis=-1)
        return t * p["cos"] + rot * p["sin"]

    q, k = rope(q), rope(k)
    scores = jnp.einsum("bhqe,bhke->bhqk", q, k) / math.sqrt(E)
    row = jnp.arange(S)[:, None]
    col = jnp.arange(S)[None, :]
    masked = (col >= row) & ~((row == 0) & (col == 0))
    scores = jnp.where(masked, NEG_INF, scores)
    probs = jax.nn.softmax(scores, axis=-1)
    attn = jnp.einsum("bhqk,bhke->bhqe", probs, v)
    attn = attn.transpose(0, 2, 1, 3).reshape(B, S, H * E) @ p["wo_full"]
    x = x + attn

    h2 = ln(x, p["ln2_g"], p["ln2_b"])
    m = jax.nn.gelu(h2 @ p["w1"] + p["b1"], approximate=True)
    m = m @ p["w2"] + p["b2"]
    return x + m


def make_params(key):
    ks = jax.random.split(key, 8)
    sc = 0.05
    wq_full = jax.random.normal(ks[0], (E, HE), jnp.float32) * sc
    wk_full = jax.random.normal(ks[1], (E, HE), jnp.float32) * sc
    wv_full = jax.random.normal(ks[2], (E, HE), jnp.float32) * sc
    wo_full = jax.random.normal(ks[3], (HE, E), jnp.float32) * sc
    w1 = jax.random.normal(ks[4], (E, HIDDEN), jnp.float32) * sc
    b1 = jax.random.normal(ks[5], (HIDDEN,), jnp.float32) * sc
    w2 = jax.random.normal(ks[6], (HIDDEN, E), jnp.float32) * sc
    b2 = jax.random.normal(ks[7], (E,), jnp.float32) * sc

    ln1_g = jnp.ones((E,), jnp.float32) * 1.1
    ln1_b = jnp.full((E,), 0.05, jnp.float32)
    ln2_g = jnp.ones((E,), jnp.float32) * 0.9
    ln2_b = jnp.full((E,), -0.05, jnp.float32)

    # RoPE tables (standard rotate-half, theta = 10000)
    inv_freq = 1.0 / (10000.0 ** (jnp.arange(0, E, 2, dtype=jnp.float32) / E))
    ang = jnp.arange(S, dtype=jnp.float32)[:, None] * inv_freq[None, :]    # (S, E/2)
    cos = jnp.concatenate([jnp.cos(ang), jnp.cos(ang)], axis=-1)           # (S, E)
    sin = jnp.concatenate([jnp.sin(ang), jnp.sin(ang)], axis=-1)

    # ============ kernel-prepped slabs (all host-side, free) ============
    scale = 1.0 / math.sqrt(E)

    # fold LN1 gamma into the QKV weights, LN1 beta into bias rows, and the
    # attention scale into the q columns (RoPE is linear -> exact).
    wq_f = (ln1_g[:, None] * wq_full) * scale
    wk_f = ln1_g[:, None] * wk_full
    wv_f = ln1_g[:, None] * wv_full
    bq_f = (ln1_b @ wq_full) * scale
    bk_f = ln1_b @ wk_full
    bv_f = ln1_b @ wv_full

    # rotate-half (with sign) as a linear map on the per-head E dim: rot(v) = v @ R
    R = jnp.zeros((E, E), jnp.float32)
    R = R.at[jnp.arange(E2) + E2, jnp.arange(E2)].set(-1.0)   # out[j<E2]  = -in[j+E2]
    R = R.at[jnp.arange(E2), jnp.arange(E2) + E2].set(1.0)    # out[j>=E2] =  in[j-E2]

    def rotcols(w, bias):   # apply R per head block on the output dim
        w_r = jnp.concatenate([w[:, h * E:(h + 1) * E] @ R for h in range(H)], axis=1)
        b_r = jnp.concatenate([bias[h * E:(h + 1) * E] @ R for h in range(H)], axis=0)
        return w_r, b_r

    wq_rot, bq_rot = rotcols(wq_f, bq_f)
    wk_rot, bk_rot = rotcols(wk_f, bk_f)

    # slab A (33, 320): [q h0|q h1|k h0|k h1|qrot h0|qrot h1|krot h0|krot h1|v h0|v h1]
    W_a = jnp.concatenate([wq_f, wk_f, wq_rot, wk_rot, wv_f], axis=1)      # (32, 320)
    b_a = jnp.concatenate([bq_f, bk_f, bq_rot, bk_rot, bv_f], axis=0)      # (320,)
    slab_a = jnp.concatenate([W_a, b_a[None, :]], axis=0)                  # (33, 320)

    # slab B (65, 128): fc1 with LN2 folded + RoPE tables tiled to (16,128) + fc1 bias
    w1_f = ln2_g[:, None] * w1                                             # (32, 128)
    b1_f = ln2_b @ w1 + b1                                                 # (128,)
    cos_wide = jnp.tile(cos, (B, 4))                                       # (16, 128)
    sin_wide = jnp.tile(sin, (B, 4))
    slab_b = jnp.concatenate([w1_f, cos_wide, sin_wide, b1_f[None, :]], axis=0)

    # slab C (225, 32): W_o (head0 rows 0-31, head1 rows 32-63), fc2,
    # block-diagonal additive attention mask over (h,b,s) rows, fc2 bias.
    idx = jnp.arange(HBS)
    grp = idx // S
    pos = idx % S
    allowed = (grp[:, None] == grp[None, :]) & (
        (pos[None, :] < pos[:, None]) | ((pos[:, None] == 0) & (pos[None, :] == 0)))
    mask_big = jnp.where(allowed, 0.0, NEG_INF).astype(jnp.float32)        # (32, 32)
    slab_c = jnp.concatenate([wo_full, w2, mask_big, b2[None, :]], axis=0)  # (225, 32)

    return {
        # reference (torch-equivalent) params
        "ln1_g": ln1_g, "ln1_b": ln1_b, "ln2_g": ln2_g, "ln2_b": ln2_b,
        "wq_full": wq_full, "wk_full": wk_full, "wv_full": wv_full, "wo_full": wo_full,
        "w1": w1, "b1": b1, "w2": w2, "b2": b2, "cos": cos, "sin": sin,
        # kernel slabs
        "slab_a": slab_a, "slab_b": slab_b, "slab_c": slab_c,
    }


if __name__ == "__main__":
    key = jax.random.PRNGKey(0)
    kx, kp = jax.random.split(key)
    x = jax.random.normal(kx, (B, S, E), jnp.float32)
    params = make_params(kp)

    out = jax.block_until_ready(alt_transformer_block(x, params))
    ref = jax.block_until_ready(reference(x, params))

    assert out.shape == (B, S, E)
    err = float(jnp.max(jnp.abs(out - ref)))
    assert jnp.allclose(out, ref, rtol=1e-4, atol=1e-4), err
    print("KERNEL_OK")
</pallas_src>

<mosaic_0001>
module attributes {stable_mosaic.version = 11 : i64} {
  func.func @block_kernel(%arg0: memref<16x32xf32, #tpu.memory_space<vmem>>, %arg1: memref<33x320xf32, #tpu.memory_space<vmem>>, %arg2: memref<65x128xf32, #tpu.memory_space<vmem>>, %arg3: memref<225x32xf32, #tpu.memory_space<vmem>>, %arg4: memref<16x32xf32, #tpu.memory_space<vmem>>) attributes {dimension_semantics = [], scalar_prefetch = 0 : i64, scratch_operands = 0 : i64, tpu.core_type = #tpu.core_type<tc>} {
    %c0 = arith.constant 0 : index
    %c0_0 = arith.constant 0 : index
    %0 = vector.load %arg0[%c0, %c0_0] : memref<16x32xf32, #tpu.memory_space<vmem>>, vector<16x32xf32>
    %cst = arith.constant dense<0.000000e+00> : vector<16xf32>
    %1 = vector.multi_reduction <add>, %0, %cst [1] : vector<16x32xf32> to vector<16xf32>
    %2 = vector.shape_cast %1 : vector<16xf32> to vector<16x1xf32>
    %3 = arith.mulf %0, %0 : vector<16x32xf32>
    %cst_1 = arith.constant dense<0.000000e+00> : vector<16xf32>
    %4 = vector.multi_reduction <add>, %3, %cst_1 [1] : vector<16x32xf32> to vector<16xf32>
    %5 = vector.shape_cast %4 : vector<16xf32> to vector<16x1xf32>
    %cst_2 = arith.constant 3.125000e-02 : f32
    %6 = vector.broadcast %cst_2 : f32 to vector<16x1xf32>
    %7 = arith.mulf %2, %6 : vector<16x1xf32>
    %cst_3 = arith.constant 3.125000e-02 : f32
    %8 = vector.broadcast %cst_3 : f32 to vector<16x1xf32>
    %9 = arith.mulf %5, %8 : vector<16x1xf32>
    %10 = arith.mulf %7, %7 : vector<16x1xf32>
    %11 = arith.subf %9, %10 : vector<16x1xf32>
    %12 = vector.broadcast %7 : vector<16x1xf32> to vector<16x32xf32>
    %13 = arith.subf %0, %12 : vector<16x32xf32>
    %cst_4 = arith.constant 9.99999974E-6 : f32
    %14 = vector.broadcast %cst_4 : f32 to vector<16x1xf32>
    %15 = arith.addf %11, %14 : vector<16x1xf32>
    %16 = math.rsqrt %15 : vector<16x1xf32>
    %17 = vector.broadcast %16 : vector<16x1xf32> to vector<16x32xf32>
    %18 = arith.mulf %13, %17 : vector<16x32xf32>
    %c0_5 = arith.constant 0 : index
    %c0_6 = arith.constant 0 : index
    %19 = vector.load %arg1[%c0_5, %c0_6] : memref<33x320xf32, #tpu.memory_space<vmem>>, vector<32x320xf32>
    %cst_7 = arith.constant dense<0.000000e+00> : vector<16x320xf32>
    %20 = tpu.matmul %18, %19, %cst_7 {dimension_numbers = #tpu.dot_dimension_numbers<[1], [0], [0], [1], [0, 0, 1, 1], [], []>} : vector<16x32xf32>, vector<32x320xf32>, vector<16x320xf32> -> vector<16x320xf32>
    %c32 = arith.constant 32 : index
    %c0_8 = arith.constant 0 : index
    %21 = vector.load %arg1[%c32, %c0_8] : memref<33x320xf32, #tpu.memory_space<vmem>>, vector<1x320xf32>
    %22 = vector.broadcast %21 : vector<1x320xf32> to vector<16x320xf32>
    %23 = arith.addf %20, %22 : vector<16x320xf32>
    %24 = vector.extract_strided_slice %23 {offsets = [0, 0], sizes = [16, 128], strides = [1, 1]} : vector<16x320xf32> to vector<16x128xf32>
    %c32_9 = arith.constant 32 : index
    %c0_10 = arith.constant 0 : index
    %25 = vector.load %arg2[%c32_9, %c0_10] : memref<65x128xf32, #tpu.memory_space<vmem>>, vector<16x128xf32>
    %26 = arith.mulf %24, %25 : vector<16x128xf32>
    %27 = vector.extract_strided_slice %23 {offsets = [0, 128], sizes = [16, 128], strides = [1, 1]} : vector<16x320xf32> to vector<16x128xf32>
    %c48 = arith.constant 48 : index
    %c0_11 = arith.constant 0 : index
    %28 = vector.load %arg2[%c48, %c0_11] : memref<65x128xf32, #tpu.memory_space<vmem>>, vector<16x128xf32>
    %29 = arith.mulf %27, %28 : vector<16x128xf32>
    %30 = arith.addf %26, %29 : vector<16x128xf32>
    %31 = vector.extract_strided_slice %23 {offsets = [0, 256], sizes = [16, 64], strides = [1, 1]} : vector<16x320xf32> to vector<16x64xf32>
    %32 = vector.extract_strided_slice %30 {offsets = [0, 0], sizes = [16, 32], strides = [1, 1]} : vector<16x128xf32> to vector<16x32xf32>
    %33 = vector.extract_strided_slice %30 {offsets = [0, 32], sizes = [16, 32], strides = [1, 1]} : vector<16x128xf32> to vector<16x32xf32>
    %34 = tpu.concatenate %32, %33 in 0 : vector<16x32xf32>, vector<16x32xf32> -> vector<32x32xf32>
    %35 = vector.extract_strided_slice %30 {offsets = [0, 64], sizes = [16, 32], strides = [1, 1]} : vector<16x128xf32> to vector<16x32xf32>
    %36 = vector.extract_strided_slice %30 {offsets = [0, 96], sizes = [16, 32], strides = [1, 1]} : vector<16x128xf32> to vector<16x32xf32>
    %37 = tpu.concatenate %35, %36 in 0 : vector<16x32xf32>, vector<16x32xf32> -> vector<32x32xf32>
    %38 = vector.extract_strided_slice %31 {offsets = [0, 0], sizes = [16, 32], strides = [1, 1]} : vector<16x64xf32> to vector<16x32xf32>
    %39 = vector.extract_strided_slice %31 {offsets = [0, 32], sizes = [16, 32], strides = [1, 1]} : vector<16x64xf32> to vector<16x32xf32>
    %40 = tpu.concatenate %38, %39 in 0 : vector<16x32xf32>, vector<16x32xf32> -> vector<32x32xf32>
    %cst_12 = arith.constant dense<0.000000e+00> : vector<32x32xf32>
    %41 = tpu.matmul %34, %37, %cst_12 {dimension_numbers = #tpu.dot_dimension_numbers<[1], [1], [0], [0], [0, 0, 1, 0], [], []>} : vector<32x32xf32>, vector<32x32xf32>, vector<32x32xf32> -> vector<32x32xf32>
    %c192 = arith.constant 192 : index
    %c0_13 = arith.constant 0 : index
    %42 = vector.load %arg3[%c192, %c0_13] : memref<225x32xf32, #tpu.memory_space<vmem>>, vector<32x32xf32>
    %43 = arith.addf %41, %42 : vector<32x32xf32>
    %cst_14 = arith.constant dense<0xFF800000> : vector<32xf32>
    %44 = vector.multi_reduction <maximumf>, %43, %cst_14 [1] : vector<32x32xf32> to vector<32xf32>
    %45 = vector.shape_cast %44 : vector<32xf32> to vector<32x1xf32>
    %46 = vector.broadcast %45 : vector<32x1xf32> to vector<32x32xf32>
    %47 = arith.subf %43, %46 : vector<32x32xf32>
    %48 = math.exp %47 : vector<32x32xf32>
    %cst_15 = arith.constant dense<0.000000e+00> : vector<32xf32>
    %49 = vector.multi_reduction <add>, %48, %cst_15 [1] : vector<32x32xf32> to vector<32xf32>
    %50 = vector.shape_cast %49 : vector<32xf32> to vector<32x1xf32>
    %51 = vector.broadcast %50 : vector<32x1xf32> to vector<32x32xf32>
    %52 = arith.divf %48, %51 : vector<32x32xf32>
    %cst_16 = arith.constant dense<0.000000e+00> : vector<32x32xf32>
    %53 = tpu.matmul %52, %40, %cst_16 {dimension_numbers = #tpu.dot_dimension_numbers<[1], [0], [0], [1], [0, 0, 1, 1], [], []>} : vector<32x32xf32>, vector<32x32xf32>, vector<32x32xf32> -> vector<32x32xf32>
    %54 = vector.extract_strided_slice %53 {offsets = [0, 0], sizes = [16, 32], strides = [1, 1]} : vector<32x32xf32> to vector<16x32xf32>
    %c0_17 = arith.constant 0 : index
    %c0_18 = arith.constant 0 : index
    %55 = vector.load %arg3[%c0_17, %c0_18] : memref<225x32xf32, #tpu.memory_space<vmem>>, vector<32x32xf32>
    %cst_19 = arith.constant dense<0.000000e+00> : vector<16x32xf32>
    %56 = tpu.matmul %54, %55, %cst_19 {dimension_numbers = #tpu.dot_dimension_numbers<[1], [0], [0], [1], [0, 0, 1, 1], [], []>} : vector<16x32xf32>, vector<32x32xf32>, vector<16x32xf32> -> vector<16x32xf32>
    %57 = vector.extract_strided_slice %53 {offsets = [16, 0], sizes = [16, 32], strides = [1, 1]} : vector<32x32xf32> to vector<16x32xf32>
    %c32_20 = arith.constant 32 : index
    %c0_21 = arith.constant 0 : index
    %58 = vector.load %arg3[%c32_20, %c0_21] : memref<225x32xf32, #tpu.memory_space<vmem>>, vector<32x32xf32>
    %cst_22 = arith.constant dense<0.000000e+00> : vector<16x32xf32>
    %59 = tpu.matmul %57, %58, %cst_22 {dimension_numbers = #tpu.dot_dimension_numbers<[1], [0], [0], [1], [0, 0, 1, 1], [], []>} : vector<16x32xf32>, vector<32x32xf32>, vector<16x32xf32> -> vector<16x32xf32>
    %60 = arith.addf %56, %59 : vector<16x32xf32>
    %61 = arith.addf %0, %60 : vector<16x32xf32>
    %cst_23 = arith.constant dense<0.000000e+00> : vector<16xf32>
    %62 = vector.multi_reduction <add>, %61, %cst_23 [1] : vector<16x32xf32> to vector<16xf32>
    %63 = vector.shape_cast %62 : vector<16xf32> to vector<16x1xf32>
    %64 = arith.mulf %61, %61 : vector<16x32xf32>
    %cst_24 = arith.constant dense<0.000000e+00> : vector<16xf32>
    %65 = vector.multi_reduction <add>, %64, %cst_24 [1] : vector<16x32xf32> to vector<16xf32>
    %66 = vector.shape_cast %65 : vector<16xf32> to vector<16x1xf32>
    %cst_25 = arith.constant 3.125000e-02 : f32
    %67 = vector.broadcast %cst_25 : f32 to vector<16x1xf32>
    %68 = arith.mulf %63, %67 : vector<16x1xf32>
    %cst_26 = arith.constant 3.125000e-02 : f32
    %69 = vector.broadcast %cst_26 : f32 to vector<16x1xf32>
    %70 = arith.mulf %66, %69 : vector<16x1xf32>
    %71 = arith.mulf %68, %68 : vector<16x1xf32>
    %72 = arith.subf %70, %71 : vector<16x1xf32>
    %73 = vector.broadcast %68 : vector<16x1xf32> to vector<16x32xf32>
    %74 = arith.subf %61, %73 : vector<16x32xf32>
    %cst_27 = arith.constant 9.99999974E-6 : f32
    %75 = vector.broadcast %cst_27 : f32 to vector<16x1xf32>
    %76 = arith.addf %72, %75 : vector<16x1xf32>
    %77 = math.rsqrt %76 : vector<16x1xf32>
    %78 = vector.broadcast %77 : vector<16x1xf32> to vector<16x32xf32>
    %79 = arith.mulf %74, %78 : vector<16x32xf32>
    %c0_28 = arith.constant 0 : index
    %c0_29 = arith.constant 0 : index
    %80 = vector.load %arg2[%c0_28, %c0_29] : memref<65x128xf32, #tpu.memory_space<vmem>>, vector<32x128xf32>
    %cst_30 = arith.constant dense<0.000000e+00> : vector<16x128xf32>
    %81 = tpu.matmul %79, %80, %cst_30 {dimension_numbers = #tpu.dot_dimension_numbers<[1], [0], [0], [1], [0, 0, 1, 1], [], []>} : vector<16x32xf32>, vector<32x128xf32>, vector<16x128xf32> -> vector<16x128xf32>
    %c64 = arith.constant 64 : index
    %c0_31 = arith.constant 0 : index
    %82 = vector.load %arg2[%c64, %c0_31] : memref<65x128xf32, #tpu.memory_space<vmem>>, vector<1x128xf32>
    %83 = vector.broadcast %82 : vector<1x128xf32> to vector<16x128xf32>
    %84 = arith.addf %81, %83 : vector<16x128xf32>
    %85 = arith.mulf %84, %84 : vector<16x128xf32>
    %86 = arith.mulf %84, %85 : vector<16x128xf32>
    %cst_32 = arith.constant 4.471500e-02 : f32
    %87 = vector.broadcast %cst_32 : f32 to vector<16x128xf32>
    %88 = arith.mulf %87, %86 : vector<16x128xf32>
    %89 = arith.addf %84, %88 : vector<16x128xf32>
    %cst_33 = arith.constant 0.797884583 : f32
    %90 = vector.broadcast %cst_33 : f32 to vector<16x128xf32>
    %91 = arith.mulf %90, %89 : vector<16x128xf32>
    %92 = math.tanh %91 : vector<16x128xf32>
    %cst_34 = arith.constant 1.000000e+00 : f32
    %93 = vector.broadcast %cst_34 : f32 to vector<16x128xf32>
    %94 = arith.addf %93, %92 : vector<16x128xf32>
    %cst_35 = arith.constant 5.000000e-01 : f32
    %95 = vector.broadcast %cst_35 : f32 to vector<16x128xf32>
    %96 = arith.mulf %95, %94 : vector<16x128xf32>
    %97 = arith.mulf %84, %96 : vector<16x128xf32>
    %c64_36 = arith.constant 64 : index
    %c0_37 = arith.constant 0 : index
    %98 = vector.load %arg3[%c64_36, %c0_37] : memref<225x32xf32, #tpu.memory_space<vmem>>, vector<128x32xf32>
    %cst_38 = arith.constant dense<0.000000e+00> : vector<16x32xf32>
    %99 = tpu.matmul %97, %98, %cst_38 {dimension_numbers = #tpu.dot_dimension_numbers<[1], [0], [0], [1], [0, 0, 1, 1], [], []>} : vector<16x128xf32>, vector<128x32xf32>, vector<16x32xf32> -> vector<16x32xf32>
    %c224 = arith.constant 224 : index
    %c0_39 = arith.constant 0 : index
    %100 = vector.load %arg3[%c224, %c0_39] : memref<225x32xf32, #tpu.memory_space<vmem>>, vector<1x32xf32>
    %101 = vector.broadcast %100 : vector<1x32xf32> to vector<16x32xf32>
    %102 = arith.addf %99, %101 : vector<16x32xf32>
    %103 = arith.addf %61, %102 : vector<16x32xf32>
    %c0_40 = arith.constant 0 : index
    %c0_41 = arith.constant 0 : index
    %104 = vector.load %arg4[%c0_40, %c0_41] : memref<16x32xf32, #tpu.memory_space<vmem>>, vector<16x32xf32>
    tpu.vector_store %arg4[%c0_40, %c0_41], %103 {strides = array<i32>} : memref<16x32xf32, #tpu.memory_space<vmem>>, vector<16x32xf32>,
    return
  }
}

</mosaic_0001>

<llo_original>
// kernel: tpu_custom_call.1
$region0: #{tpu_custom_call.1}
  #allocation0 [shape = 'u32[]', space=smem, size = 0x4, offset = 0x4, fixed_abs, tag = 'smem constant byte address 0x4 - core index']
  #allocation1 [shape = 'u32[144,128]{1,0:T(1,128)}', space=vmem, size = 0x12000, scoped, tag = 'internal scratch']
  %s0 = inlined_call_operand.vmem [shape: f32[16,32], index: 0, kind: input, shape index: {}]
  %s1 = inlined_call_operand.vmem [shape: f32[33,320], index: 1, kind: input, shape index: {}]
  %s2 = inlined_call_operand.vmem [shape: f32[65,128], index: 2, kind: input, shape index: {}]
  %s3 = inlined_call_operand.vmem [shape: f32[225,32], index: 3, kind: input, shape index: {}]
  %s4 = inlined_call_operand.hbm [shape: f32[16,32], index: 4, kind: output, shape index: {}]
  %s5 = sld [smem:[#allocation0]]
  $region26: #{tpu_custom_call.1} parent=0
    _
  %s7 = ssub.s32 1, %s5
  %s8 = scalar_select 0, %s7, %s5
  $region1: #{tpu_custom_call.1} parent=0
    #allocation2 [shape = 'u8[8192]{0}', space=vmem, size = 0x2000, scoped, tag = 'output window, operand 0, single buffered']
    #allocation3 [shape = 's32[1]{0}', space=sflag, size = 0x4, scoped, tag = 'scoped memory for tpu_custom_call.1']
    %9 = vsyncpa [#allocation3], 0
    // Predicated region
    $region2: #{tpu_custom_call.1} parent=1 // pred_check
      _
    $region3: #{tpu_custom_call.1} parent=1 // pred_check_branch
      %11 = sbr.rel (0) target = $region5
    $region4: #{tpu_custom_call.1} parent=1 // pred_region
      _
    $region5: #{tpu_custom_call.1} parent=1 // pred_fallthru
      _
    // Predicated region
    $region6: #{tpu_custom_call.1} parent=1 // pred_check
      _
    $region7: #{tpu_custom_call.1} parent=1 // pred_check_branch
      %13 = sbr.rel (0) target = $region9
    $region8: #{tpu_custom_call.1} parent=1 // pred_region
      _
    $region9: #{tpu_custom_call.1} parent=1 // pred_fallthru
      _
    // Predicated region
    $region10: #{tpu_custom_call.1} parent=1 // pred_check
      _
    $region11: #{tpu_custom_call.1} parent=1 // pred_check_branch
      %15 = sbr.rel (0) target = $region13
    $region12: #{tpu_custom_call.1} parent=1 // pred_region
      _
    $region13: #{tpu_custom_call.1} parent=1 // pred_fallthru
      _
    // Predicated region
    $region14: #{tpu_custom_call.1} parent=1 // pred_check
      _
    $region15: #{tpu_custom_call.1} parent=1 // pred_check_branch
      %17 = sbr.rel (0) target = $region17
    $region16: #{tpu_custom_call.1} parent=1 // pred_region
      _
    $region17: #{tpu_custom_call.1} parent=1 // pred_fallthru
      _
    %v18 = vld [vmem:[%s0] sm:$0xff]
    %v19 = vld [vmem:[%s0 + $0x8] sm:$0xff]
    %vm20 = vcmask 261120
    %v21 = vsel %vm20, %v18, 0.0
    %22 = vadd.xlane.f32.xlu0 %v21
    %v23 = vpop.xlane.xlu0 %22
    %v24 = vsel %vm20, %v19, 0.0
    %25 = vadd.xlane.f32.xlu0 %v24
    %v26 = vpop.xlane.xlu0 %25
    %v27 = vmul.f32 %v18, %v18
    %v28 = vmul.f32 %v19, %v19
    %v29 = vsel %vm20, %v27, 0.0
    %30 = vadd.xlane.f32.xlu0 %v29
    %v31 = vpop.xlane.xlu0 %30
    %v32 = vsel %vm20, %v28, 0.0
    %33 = vadd.xlane.f32.xlu0 %v32
    %v34 = vpop.xlane.xlu0 %33
    %v35 = vmul.f32 %v23, 0.03125
    %v36 = vmul.f32 %v26, 0.03125
    %v37 = vmul.f32 %v31, 0.03125
    %v38 = vmul.f32 %v34, 0.03125
    %v39 = vmul.f32 %v35, %v35
    %v40 = vmul.f32 %v36, %v36
    %v41 = vsub.f32 %v37, %v39
    %v42 = vsub.f32 %v38, %v40
    %v43 = vsub.f32 %v18, %v35
    %v44 = vsub.f32 %v19, %v36
    %v45 = vadd.f32 %v41, 1e-05
    %v46 = vadd.f32 %v42, 1e-05
    %v47 = vrsqrt.pop %v45
    %v48 = vrsqrt.pop %v46
    %v49 = vmul.f32 %v43, %v47
    %v50 = vmul.f32 %v44, %v48
    %v51 = vld [vmem:[%s1] sm:$0xff]
    %v52 = vld [vmem:[%s1 + $0x8] sm:$0xff]
    %v53 = vld [vmem:[%s1 + $0x10] sm:$0xff]
    %v54 = vld [vmem:[%s1 + $0x18] sm:$0xff]
    %v55 = vld [vmem:[%s1 + $0x20] sm:$0xff]
    %v56 = vld [vmem:[%s1 + $0x28] sm:$0xff]
    %v57 = vld [vmem:[%s1 + $0x30] sm:$0xff]
    %v58 = vld [vmem:[%s1 + $0x38] sm:$0xff]
    %v59 = vld [vmem:[%s1 + $0x40] sm:$0xff]
    %v60 = vld [vmem:[%s1 + $0x48] sm:$0xff]
    %v61 = vld [vmem:[%s1 + $0x50] sm:$0xff]
    %v62 = vld [vmem:[%s1 + $0x58] sm:$0xff]
    %s63 = scalar_lea.vmem %s1, 96
    %v64 = vld [vmem:[%s63] ss:$8 sm:$0x7]
    %v66 = vlaneseq
    %v67 = vshrl.u32 %v66, 7
    %v68 = vsub.s32 0, %v67
    %v69 = vrot.slane %v64, %v68
    %v70 = vlaneseq
    %v71 = vshrl.u32 %v70, 7
    %v72 = vsub.s32 1, %v71
    %v73 = vrot.slane %v64, %v72
    %v74 = vlaneseq
    %v75 = vshrl.u32 %v74, 7
    %v76 = vsub.s32 2, %v75
    %v77 = vrot.slane %v64, %v76
    %v82 = vsel %vm20, %v49, 0
    %v85 = vsel %vm20, %v50, 0
    %87 = vmatprep.subr.mxu0 0.0
    %88 = vmatpush1.msra.mxu0 0.0
    %89 = vmatprep.subr.mxu0 0.0
    %90 = vmatpush1.msra.mxu0 0.0
    %91 = vmatprep.subr.mxu0 0.0
    %92 = vmatpush1.msra.mxu0 0.0
    %93 = vmatprep.subr.mxu0 0.0
    %94 = vmatpush1.msra.mxu0 0.0
    %95 = vmatprep.subr.mxu0 0.0
    %96 = vmatpush1.msra.mxu0 0.0
    %97 = vmatprep.subr.mxu0 0.0
    %98 = vmatpush1.msra.mxu0 0.0
    %99 = vmatprep.subr.mxu0 0.0
    %100 = vmatpush1.msra.mxu0 0.0
    %101 = vmatprep.subr.mxu0 0.0
    %102 = vmatpush1.msra.mxu0 0.0
    %103 = vmatprep.subr.mxu0 0.0
    %104 = vmatpush1.msra.mxu0 0.0
    %105 = vmatprep.subr.mxu0 0.0
    %106 = vmatpush1.msra.mxu0 0.0
    %107 = vmatprep.subr.mxu0 0.0
    %108 = vmatpush1.msra.mxu0 0.0
    %109 = vmatprep.subr.mxu0 0.0
    %110 = vmatpush1.msra.mxu0 0.0
    %111 = vmatprep.subr.mxu0 %v61
    %112 = vmatpush1.msra.mxu0 %v60
    %113 = vmatprep.subr.mxu0 %v58
    %114 = vmatpush1.msra.mxu0 %v57
    %115 = vmatprep.subr.mxu0 %v55
    %116 = vmatpush1.msra.mxu0 %v54
    %117 = vmatprep.subr.mxu0 %v52
    %118 = vmatpush1.msra.mxu0 %v51
    %119 = vmatprep.subr.mxu0 0.0
    %120 = vmatpush2.msra.mxu0 0.0
    %121 = vmatprep.subr.mxu0 0.0
    %122 = vmatpush2.msra.mxu0 0.0
    %123 = vmatprep.subr.mxu0 0.0
    %124 = vmatpush2.msra.mxu0 0.0
    %125 = vmatprep.subr.mxu0 0.0
    %126 = vmatpush2.msra.mxu0 0.0
    %127 = vmatprep.subr.mxu0 0.0
    %128 = vmatpush2.msra.mxu0 0.0
    %129 = vmatprep.subr.mxu0 0.0
    %130 = vmatpush2.msra.mxu0 0.0
    %131 = vmatprep.subr.mxu0 0.0
    %132 = vmatpush2.msra.mxu0 0.0
    %133 = vmatprep.subr.mxu0 0.0
    %134 = vmatpush2.msra.mxu0 0.0
    %135 = vmatprep.subr.mxu0 0.0
    %136 = vmatpush2.msra.mxu0 0.0
    %137 = vmatprep.subr.mxu0 0.0
    %138 = vmatpush2.msra.mxu0 0.0
    %139 = vmatprep.subr.mxu0 0.0
    %140 = vmatpush2.msra.mxu0 0.0
    %141 = vmatprep.subr.mxu0 0.0
    %142 = vmatpush2.msra.mxu0 0.0
    %143 = vmatprep.subr.mxu0 0.0
    %144 = vmatpush2.msra.mxu0 0.0
    %145 = vmatprep.subr.mxu0 0.0
    %146 = vmatpush2.msra.mxu0 0.0
    %147 = vmatprep.subr.mxu0 0.0
    %148 = vmatpush2.msra.mxu0 0.0
    %149 = vmatprep.subr.mxu0 0.0
    %150 = vmatpush2.msra.mxu0 0.0
    %151 = vmatprep.mubr.f32.mxu0 0.0
    %152 = vmatmul.mubr.f32.gmra.mxu0 %v82
    %v153 = vpop.f32.mrf.mxu0
    %v154 = vadd.f32 %v69, %v153
    %v155 = vpop.f32.mrf.mxu0
    %v156 = vadd.f32 %v73, %v155
    %157 = vmatprep.mubr.f32.mxu0 0.0
    %158 = vmatmul.mubr.f32.gmra.mxu0 %v85
    %v159 = vpop.f32.mrf.mxu0
    %v160 = vadd.f32 %v69, %v159
    %v161 = vpop.f32.mrf.mxu0
    %v162 = vadd.f32 %v73, %v161
    %163 = vdwg.mxu0
    %164 = vmatprep.subr.mxu0 0.0
    %165 = vmatpush1.msra.mxu0 0.0
    %166 = vmatprep.subr.mxu0 0.0
    %167 = vmatpush1.msra.mxu0 0.0
    %168 = vmatprep.subr.mxu0 0.0
    %169 = vmatpush1.msra.mxu0 0.0
    %170 = vmatprep.subr.mxu0 0.0
    %171 = vmatpush1.msra.mxu0 0.0
    %172 = vmatprep.subr.mxu0 0.0
    %173 = vmatpush1.msra.mxu0 0.0
    %174 = vmatprep.subr.mxu0 0.0
    %175 = vmatpush1.msra.mxu0 0.0
    %176 = vmatprep.subr.mxu0 0.0
    %177 = vmatpush1.msra.mxu0 0.0
    %178 = vmatprep.subr.mxu0 0.0
    %179 = vmatpush1.msra.mxu0 0.0
    %180 = vmatprep.subr.mxu0 0.0
    %181 = vmatpush1.msra.mxu0 0.0
    %182 = vmatprep.subr.mxu0 0.0
    %183 = vmatpush1.msra.mxu0 0.0
    %184 = vmatprep.subr.mxu0 0.0
    %185 = vmatpush1.msra.mxu0 0.0
    %186 = vmatprep.subr.mxu0 0.0
    %187 = vmatpush1.msra.mxu0 0.0
    %188 = vmatprep.subr.mxu0 0.0
    %189 = vmatpush1.msra.mxu0 %v62
    %190 = vmatprep.subr.mxu0 0.0
    %191 = vmatpush1.msra.mxu0 %v59
    %192 = vmatprep.subr.mxu0 0.0
    %193 = vmatpush1.msra.mxu0 %v56
    %194 = vmatprep.subr.mxu0 0.0
    %195 = vmatpush1.msra.mxu0 %v53
    %196 = vmatprep.subr.mxu0 0.0
    %197 = vmatpush2.msra.mxu0 0.0
    %198 = vmatprep.subr.mxu0 0.0
    %199 = vmatpush2.msra.mxu0 0.0
    %200 = vmatprep.subr.mxu0 0.0
    %201 = vmatpush2.msra.mxu0 0.0
    %202 = vmatprep.subr.mxu0 0.0
    %203 = vmatpush2.msra.mxu0 0.0
    %204 = vmatprep.subr.mxu0 0.0
    %205 = vmatpush2.msra.mxu0 0.0
    %206 = vmatprep.subr.mxu0 0.0
    %207 = vmatpush2.msra.mxu0 0.0
    %208 = vmatprep.subr.mxu0 0.0
    %209 = vmatpush2.msra.mxu0 0.0
    %210 = vmatprep.subr.mxu0 0.0
    %211 = vmatpush2.msra.mxu0 0.0
    %212 = vmatprep.subr.mxu0 0.0
    %213 = vmatpush2.msra.mxu0 0.0
    %214 = vmatprep.subr.mxu0 0.0
    %215 = vmatpush2.msra.mxu0 0.0
    %216 = vmatprep.subr.mxu0 0.0
    %217 = vmatpush2.msra.mxu0 0.0
    %218 = vmatprep.subr.mxu0 0.0
    %219 = vmatpush2.msra.mxu0 0.0
    %220 = vmatprep.subr.mxu0 0.0
    %221 = vmatpush2.msra.mxu0 0.0
    %222 = vmatprep.subr.mxu0 0.0
    %223 = vmatpush2.msra.mxu0 0.0
    %224 = vmatprep.subr.mxu0 0.0
    %225 = vmatpush2.msra.mxu0 0.0
    %226 = vmatprep.subr.mxu0 0.0
    %227 = vmatpush2.msra.mxu0 0.0
    %228 = vmatprep.mubr.f32.mxu0 0.0
    %229 = vmatmul.mubr.f32.gmra.mxu0 %v82
    %v230 = vpop.f32.mrf.mxu0
    %v231 = vadd.f32 %v77, %v230
    %v232 = vpop.f32.mrf.mxu0
    %233 = vmatprep.mubr.f32.mxu0 0.0
    %234 = vmatmul.mubr.f32.gmra.mxu0 %v85
    %v235 = vpop.f32.mrf.mxu0
    %v236 = vadd.f32 %v77, %v235
    %v237 = vpop.f32.mrf.mxu0
    %238 = vdwg.mxu0
    %v239 = vld [vmem:[%s2 + $0x20] sm:$0xff]
    %v240 = vld [vmem:[%s2 + $0x28] sm:$0xff]
    %v241 = vmul.f32 %v154, %v239
    %v242 = vmul.f32 %v160, %v240
    %v243 = vld [vmem:[%s2 + $0x30] sm:$0xff]
    %v244 = vld [vmem:[%s2 + $0x38] sm:$0xff]
    %v245 = vmul.f32 %v156, %v243
    %v246 = vmul.f32 %v162, %v244
    %v247 = vadd.f32 %v241, %v245
    %v248 = vadd.f32 %v242, %v246
    %251 = vrot.lane.b32.xlu0 %v247, 96
    %v252 = vpop.permute.xlu0 %251
    %253 = vrot.lane.b32.xlu0 %v248, 96
    %v254 = vpop.permute.xlu0 %253
    %257 = vrot.lane.b32.xlu0 %v231, 96
    %v258 = vpop.permute.xlu0 %257
    %259 = vrot.lane.b32.xlu0 %v236, 96
    %v260 = vpop.permute.xlu0 %259
    %v263 = vld [vmem:[%s3 + $0xc0] sm:$0xff]
    %v264 = vld [vmem:[%s3 + $0xc8] sm:$0xff]
    %v265 = vld [vmem:[%s3 + $0xd0] sm:$0xff]
    %v266 = vld [vmem:[%s3 + $0xd8] sm:$0xff]
    %267 = vrot.lane.b32.xlu0 %v247, 64
    %v268 = vpop.permute.xlu0 %267
    %269 = vrot.lane.b32.xlu0 %v248, 64
    %v270 = vpop.permute.xlu0 %269
    %271 = vrot.lane.b32.xlu0 %v252, 64
    %v272 = vpop.permute.xlu0 %271
    %273 = vrot.lane.b32.xlu0 %v254, 64
    %v274 = vpop.permute.xlu0 %273
    %v275 = vsel %vm20, %v247, 0
    %v277 = vsel %vm20, %v248, 0
    %v279 = vsel %vm20, %v252, 0
    %v281 = vsel %vm20, %v254, 0
    %v283 = vsel %vm20, %v268, 0
    %v285 = vsel %vm20, %v270, 0
    %v287 = vsel %vm20, %v272, 0
    %v289 = vsel %vm20, %v274, 0
    %291 = vmatprep.subr.mxu0 0.0
    %292 = vmatpush1.xpose.msra.mxu0 0.0
    %293 = vmatprep.subr.mxu0 0.0
    %294 = vmatpush1.xpose.msra.mxu0 0.0
    %295 = vmatprep.subr.mxu0 0.0
    %296 = vmatpush1.xpose.msra.mxu0 0.0
    %297 = vmatprep.subr.mxu0 0.0
    %298 = vmatpush1.xpose.msra.mxu0 0.0
    %299 = vmatprep.subr.mxu0 0.0
    %300 = vmatpush1.xpose.msra.mxu0 0.0
    %301 = vmatprep.subr.mxu0 0.0
    %302 = vmatpush1.xpose.msra.mxu0 0.0
    %303 = vmatprep.subr.mxu0 0.0
    %304 = vmatpush1.xpose.msra.mxu0 0.0
    %305 = vmatprep.subr.mxu0 0.0
    %306 = vmatpush1.xpose.msra.mxu0 0.0
    %307 = vmatprep.subr.mxu0 0.0
    %308 = vmatpush1.xpose.msra.mxu0 0.0
    %309 = vmatprep.subr.mxu0 0.0
    %310 = vmatpush1.xpose.msra.mxu0 0.0
    %311 = vmatprep.subr.mxu0 0.0
    %312 = vmatpush1.xpose.msra.mxu0 0.0
    %313 = vmatprep.subr.mxu0 0.0
    %314 = vmatpush1.xpose.msra.mxu0 0.0
    %315 = vmatprep.subr.mxu0 0.0
    %316 = vmatpush1.xpose.msra.mxu0 %v289
    %317 = vmatprep.subr.mxu0 0.0
    %318 = vmatpush1.xpose.msra.mxu0 %v287
    %319 = vmatprep.subr.mxu0 0.0
    %320 = vmatpush1.xpose.msra.mxu0 %v285
    %321 = vmatprep.subr.mxu0 0.0
    %322 = vmatpush1.xpose.msra.mxu0 %v283
    %323 = vmatprep.subr.mxu0 0.0
    %324 = vmatpush2.xpose.msra.mxu0 0.0
    %325 = vmatprep.subr.mxu0 0.0
    %326 = vmatpush2.xpose.msra.mxu0 0.0
    %327 = vmatprep.subr.mxu0 0.0
    %328 = vmatpush2.xpose.msra.mxu0 0.0
    %329 = vmatprep.subr.mxu0 0.0
    %330 = vmatpush2.xpose.msra.mxu0 0.0
    %331 = vmatprep.subr.mxu0 0.0
    %332 = vmatpush2.xpose.msra.mxu0 0.0
    %333 = vmatprep.subr.mxu0 0.0
    %334 = vmatpush2.xpose.msra.mxu0 0.0
    %335 = vmatprep.subr.mxu0 0.0
    %336 = vmatpush2.xpose.msra.mxu0 0.0
    %337 = vmatprep.subr.mxu0 0.0
    %338 = vmatpush2.xpose.msra.mxu0 0.0
    %339 = vmatprep.subr.mxu0 0.0
    %340 = vmatpush2.xpose.msra.mxu0 0.0
    %341 = vmatprep.subr.mxu0 0.0
    %342 = vmatpush2.xpose.msra.mxu0 0.0
    %343 = vmatprep.subr.mxu0 0.0
    %344 = vmatpush2.xpose.msra.mxu0 0.0
    %345 = vmatprep.subr.mxu0 0.0
    %346 = vmatpush2.xpose.msra.mxu0 0.0
    %347 = vmatprep.subr.mxu0 0.0
    %348 = vmatpush2.xpose.msra.mxu0 0.0
    %349 = vmatprep.subr.mxu0 0.0
    %350 = vmatpush2.xpose.msra.mxu0 0.0
    %351 = vmatprep.subr.mxu0 0.0
    %352 = vmatpush2.xpose.msra.mxu0 0.0
    %353 = vmatprep.subr.mxu0 0.0
    %354 = vmatpush2.xpose.msra.mxu0 0.0
    %355 = vmatprep.mubr.f32.mxu0 0.0
    %356 = vmatmul.mubr.f32.gmra.mxu0 %v275
    %v357 = vpop.f32.mrf.mxu0
    %v358 = vadd.f32 %v263, %v357
    %v359 = vpop.f32.mrf.mxu0
    %360 = vmatprep.mubr.f32.mxu0 0.0
    %361 = vmatmul.mubr.f32.gmra.mxu0 %v277
    %v362 = vpop.f32.mrf.mxu0
    %v363 = vadd.f32 %v264, %v362
    %v364 = vpop.f32.mrf.mxu0
    %365 = vmatprep.mubr.f32.mxu0 0.0
    %366 = vmatmul.mubr.f32.gmra.mxu0 %v279
    %v367 = vpop.f32.mrf.mxu0
    %v368 = vadd.f32 %v265, %v367
    %v369 = vpop.f32.mrf.mxu0
    %370 = vmatprep.mubr.f32.mxu0 0.0
    %371 = vmatmul.mubr.f32.gmra.mxu0 %v281
    %v372 = vpop.f32.mrf.mxu0
    %v373 = vadd.f32 %v266, %v372
    %v374 = vpop.f32.mrf.mxu0
    %375 = vdwg.mxu0
    %v376 = vsel %vm20, %v358, -inf
    %377 = vmax.xlane.f32.xlu0 %v376
    %v378 = vpop.xlane.xlu0 %377
    %v379 = vsel %vm20, %v363, -inf
    %380 = vmax.xlane.f32.xlu0 %v379
    %v381 = vpop.xlane.xlu0 %380
    %v382 = vsel %vm20, %v368, -inf
    %383 = vmax.xlane.f32.xlu0 %v382
    %v384 = vpop.xlane.xlu0 %383
    %v385 = vsel %vm20, %v373, -inf
    %386 = vmax.xlane.f32.xlu0 %v385
    %v387 = vpop.xlane.xlu0 %386
    %v388 = vsub.f32 %v358, %v378
    %v389 = vsub.f32 %v363, %v381
    %v390 = vsub.f32 %v368, %v384
    %v391 = vsub.f32 %v373, %v387
    %v392 = vmul.f32 %v388, 1.442695
    %v393 = vpow.pop %v392
    %v394 = vmul.f32 %v389, 1.442695
    %v395 = vpow.pop %v394
    %v396 = vmul.f32 %v390, 1.442695
    %v397 = vpow.pop %v396
    %v398 = vmul.f32 %v391, 1.442695
    %v399 = vpow.pop %v398
    %v400 = vsel %vm20, %v393, 0.0
    %401 = vadd.xlane.f32.xlu0 %v400
    %v402 = vpop.xlane.xlu0 %401
    %v403 = vsel %vm20, %v395, 0.0
    %404 = vadd.xlane.f32.xlu0 %v403
    %v405 = vpop.xlane.xlu0 %404
    %v406 = vsel %vm20, %v397, 0.0
    %407 = vadd.xlane.f32.xlu0 %v406
    %v408 = vpop.xlane.xlu0 %407
    %v409 = vsel %vm20, %v399, 0.0
    %410 = vadd.xlane.f32.xlu0 %v409
    %v411 = vpop.xlane.xlu0 %410
    %v412 = vrcp.pop %v402
    %v413 = vmul.f32 %v393, %v412
    %v414 = vrcp.pop %v405
    %v415 = vmul.f32 %v395, %v414
    %v416 = vrcp.pop %v408
    %v417 = vmul.f32 %v397, %v416
    %v418 = vrcp.pop %v411
    %v419 = vmul.f32 %v399, %v418
    %v421 = vsel %vm20, %v413, 0
    %v424 = vsel %vm20, %v415, 0
    %v427 = vsel %vm20, %v417, 0
    %v430 = vsel %vm20, %v419, 0
    %432 = vmatprep.subr.mxu0 0.0
    %433 = vmatpush1.msra.mxu0 0.0
    %434 = vmatprep.subr.mxu0 0.0
    %435 = vmatpush1.msra.mxu0 0.0
    %436 = vmatprep.subr.mxu0 0.0
    %437 = vmatpush1.msra.mxu0 0.0
    %438 = vmatprep.subr.mxu0 0.0
    %439 = vmatpush1.msra.mxu0 0.0
    %440 = vmatprep.subr.mxu0 0.0
    %441 = vmatpush1.msra.mxu0 0.0
    %442 = vmatprep.subr.mxu0 0.0
    %443 = vmatpush1.msra.mxu0 0.0
    %444 = vmatprep.subr.mxu0 0.0
    %445 = vmatpush1.msra.mxu0 0.0
    %446 = vmatprep.subr.mxu0 0.0
    %447 = vmatpush1.msra.mxu0 0.0
    %448 = vmatprep.subr.mxu0 0.0
    %449 = vmatpush1.msra.mxu0 0.0
    %450 = vmatprep.subr.mxu0 0.0
    %451 = vmatpush1.msra.mxu0 0.0
    %452 = vmatprep.subr.mxu0 0.0
    %453 = vmatpush1.msra.mxu0 0.0
    %454 = vmatprep.subr.mxu0 0.0
    %455 = vmatpush1.msra.mxu0 0.0
    %456 = vmatprep.subr.mxu0 0.0
    %457 = vmatpush1.msra.mxu0 %v260
    %458 = vmatprep.subr.mxu0 0.0
    %459 = vmatpush1.msra.mxu0 %v258
    %460 = vmatprep.subr.mxu0 0.0
    %461 = vmatpush1.msra.mxu0 %v236
    %462 = vmatprep.subr.mxu0 0.0
    %463 = vmatpush1.msra.mxu0 %v231
    %464 = vmatprep.subr.mxu0 0.0
    %465 = vmatpush2.msra.mxu0 0.0
    %466 = vmatprep.subr.mxu0 0.0
    %467 = vmatpush2.msra.mxu0 0.0
    %468 = vmatprep.subr.mxu0 0.0
    %469 = vmatpush2.msra.mxu0 0.0
    %470 = vmatprep.subr.mxu0 0.0
    %471 = vmatpush2.msra.mxu0 0.0
    %472 = vmatprep.subr.mxu0 0.0
    %473 = vmatpush2.msra.mxu0 0.0
    %474 = vmatprep.subr.mxu0 0.0
    %475 = vmatpush2.msra.mxu0 0.0
    %476 = vmatprep.subr.mxu0 0.0
    %477 = vmatpush2.msra.mxu0 0.0
    %478 = vmatprep.subr.mxu0 0.0
    %479 = vmatpush2.msra.mxu0 0.0
    %480 = vmatprep.subr.mxu0 0.0
    %481 = vmatpush2.msra.mxu0 0.0
    %482 = vmatprep.subr.mxu0 0.0
    %483 = vmatpush2.msra.mxu0 0.0
    %484 = vmatprep.subr.mxu0 0.0
    %485 = vmatpush2.msra.mxu0 0.0
    %486 = vmatprep.subr.mxu0 0.0
    %487 = vmatpush2.msra.mxu0 0.0
    %488 = vmatprep.subr.mxu0 0.0
    %489 = vmatpush2.msra.mxu0 0.0
    %490 = vmatprep.subr.mxu0 0.0
    %491 = vmatpush2.msra.mxu0 0.0
    %492 = vmatprep.subr.mxu0 0.0
    %493 = vmatpush2.msra.mxu0 0.0
    %494 = vmatprep.subr.mxu0 0.0
    %495 = vmatpush2.msra.mxu0 0.0
    %496 = vmatprep.mubr.f32.mxu0 0.0
    %497 = vmatmul.mubr.f32.gmra.mxu0 %v421
    %v498 = vpop.f32.mrf.mxu0
    %v499 = vadd.f32 0.0, %v498
    %v500 = vpop.f32.mrf.mxu0
    %501 = vmatprep.mubr.f32.mxu0 0.0
    %502 = vmatmul.mubr.f32.gmra.mxu0 %v424
    %v503 = vpop.f32.mrf.mxu0
    %v504 = vadd.f32 0.0, %v503
    %v505 = vpop.f32.mrf.mxu0
    %506 = vmatprep.mubr.f32.mxu0 0.0
    %507 = vmatmul.mubr.f32.gmra.mxu0 %v427
    %v508 = vpop.f32.mrf.mxu0
    %v509 = vadd.f32 0.0, %v508
    %v510 = vpop.f32.mrf.mxu0
    %511 = vmatprep.mubr.f32.mxu0 0.0
    %512 = vmatmul.mubr.f32.gmra.mxu0 %v430
    %v513 = vpop.f32.mrf.mxu0
    %v514 = vadd.f32 0.0, %v513
    %v515 = vpop.f32.mrf.mxu0
    %516 = vdwg.mxu0
    %v517 = vld [vmem:[%s3] sm:$0xff]
    %v518 = vld [vmem:[%s3 + $0x8] sm:$0xff]
    %v519 = vld [vmem:[%s3 + $0x10] sm:$0xff]
    %v520 = vld [vmem:[%s3 + $0x18] sm:$0xff]
    %v521 = vld [vmem:[%s3 + $0x20] sm:$0xff]
    %v522 = vld [vmem:[%s3 + $0x28] sm:$0xff]
    %v523 = vld [vmem:[%s3 + $0x30] sm:$0xff]
    %v524 = vld [vmem:[%s3 + $0x38] sm:$0xff]
    %v526 = vsel %vm20, %v509, 0
    %v529 = vsel %vm20, %v514, 0
    %531 = vmatprep.subr.mxu0 0.0
    %532 = vmatpush1.msra.mxu0 0.0
    %533 = vmatprep.subr.mxu0 0.0
    %534 = vmatpush1.msra.mxu0 0.0
    %535 = vmatprep.subr.mxu0 0.0
    %536 = vmatpush1.msra.mxu0 0.0
    %537 = vmatprep.subr.mxu0 0.0
    %538 = vmatpush1.msra.mxu0 0.0
    %539 = vmatprep.subr.mxu0 0.0
    %540 = vmatpush1.msra.mxu0 0.0
    %541 = vmatprep.subr.mxu0 0.0
    %542 = vmatpush1.msra.mxu0 0.0
    %543 = vmatprep.subr.mxu0 0.0
    %544 = vmatpush1.msra.mxu0 0.0
    %545 = vmatprep.subr.mxu0 0.0
    %546 = vmatpush1.msra.mxu0 0.0
    %547 = vmatprep.subr.mxu0 0.0
    %548 = vmatpush1.msra.mxu0 0.0
    %549 = vmatprep.subr.mxu0 0.0
    %550 = vmatpush1.msra.mxu0 0.0
    %551 = vmatprep.subr.mxu0 0.0
    %552 = vmatpush1.msra.mxu0 0.0
    %553 = vmatprep.subr.mxu0 0.0
    %554 = vmatpush1.msra.mxu0 0.0
    %555 = vmatprep.subr.mxu0 0.0
    %556 = vmatpush1.msra.mxu0 %v524
    %557 = vmatprep.subr.mxu0 0.0
    %558 = vmatpush1.msra.mxu0 %v523
    %559 = vmatprep.subr.mxu0 0.0
    %560 = vmatpush1.msra.mxu0 %v522
    %561 = vmatprep.subr.mxu0 0.0
    %562 = vmatpush1.msra.mxu0 %v521
    %563 = vmatprep.subr.mxu0 0.0
    %564 = vmatpush2.msra.mxu0 0.0
    %565 = vmatprep.subr.mxu0 0.0
    %566 = vmatpush2.msra.mxu0 0.0
    %567 = vmatprep.subr.mxu0 0.0
    %568 = vmatpush2.msra.mxu0 0.0
    %569 = vmatprep.subr.mxu0 0.0
    %570 = vmatpush2.msra.mxu0 0.0
    %571 = vmatprep.subr.mxu0 0.0
    %572 = vmatpush2.msra.mxu0 0.0
    %573 = vmatprep.subr.mxu0 0.0
    %574 = vmatpush2.msra.mxu0 0.0
    %575 = vmatprep.subr.mxu0 0.0
    %576 = vmatpush2.msra.mxu0 0.0
    %577 = vmatprep.subr.mxu0 0.0
    %578 = vmatpush2.msra.mxu0 0.0
    %579 = vmatprep.subr.mxu0 0.0
    %580 = vmatpush2.msra.mxu0 0.0
    %581 = vmatprep.subr.mxu0 0.0
    %582 = vmatpush2.msra.mxu0 0.0
    %583 = vmatprep.subr.mxu0 0.0
    %584 = vmatpush2.msra.mxu0 0.0
    %585 = vmatprep.subr.mxu0 0.0
    %586 = vmatpush2.msra.mxu0 0.0
    %587 = vmatprep.subr.mxu0 0.0
    %588 = vmatpush2.msra.mxu0 0.0
    %589 = vmatprep.subr.mxu0 0.0
    %590 = vmatpush2.msra.mxu0 0.0
    %591 = vmatprep.subr.mxu0 0.0
    %592 = vmatpush2.msra.mxu0 0.0
    %593 = vmatprep.subr.mxu0 0.0
    %594 = vmatpush2.msra.mxu0 0.0
    %595 = vmatprep.mubr.f32.mxu0 0.0
    %596 = vmatmul.mubr.f32.gmra.mxu0 %v526
    %v597 = vpop.f32.mrf.mxu0
    %v598 = vadd.f32 0.0, %v597
    %v599 = vpop.f32.mrf.mxu0
    %600 = vmatprep.mubr.f32.mxu0 0.0
    %601 = vmatmul.mubr.f32.gmra.mxu0 %v529
    %v602 = vpop.f32.mrf.mxu0
    %v603 = vadd.f32 0.0, %v602
    %v604 = vpop.f32.mrf.mxu0
    %605 = vdwg.mxu0
    %v607 = vsel %vm20, %v499, 0
    %v610 = vsel %vm20, %v504, 0
    %612 = vmatprep.subr.mxu0 0.0
    %613 = vmatpush1.msra.mxu0 0.0
    %614 = vmatprep.subr.mxu0 0.0
    %615 = vmatpush1.msra.mxu0 0.0
    %616 = vmatprep.subr.mxu0 0.0
    %617 = vmatpush1.msra.mxu0 0.0
    %618 = vmatprep.subr.mxu0 0.0
    %619 = vmatpush1.msra.mxu0 0.0
    %620 = vmatprep.subr.mxu0 0.0
    %621 = vmatpush1.msra.mxu0 0.0
    %622 = vmatprep.subr.mxu0 0.0
    %623 = vmatpush1.msra.mxu0 0.0
    %624 = vmatprep.subr.mxu0 0.0
    %625 = vmatpush1.msra.mxu0 0.0
    %626 = vmatprep.subr.mxu0 0.0
    %627 = vmatpush1.msra.mxu0 0.0
    %628 = vmatprep.subr.mxu0 0.0
    %629 = vmatpush1.msra.mxu0 0.0
    %630 = vmatprep.subr.mxu0 0.0
    %631 = vmatpush1.msra.mxu0 0.0
    %632 = vmatprep.subr.mxu0 0.0
    %633 = vmatpush1.msra.mxu0 0.0
    %634 = vmatprep.subr.mxu0 0.0
    %635 = vmatpush1.msra.mxu0 0.0
    %636 = vmatprep.subr.mxu0 0.0
    %637 = vmatpush1.msra.mxu0 %v520
    %638 = vmatprep.subr.mxu0 0.0
    %639 = vmatpush1.msra.mxu0 %v519
    %640 = vmatprep.subr.mxu0 0.0
    %641 = vmatpush1.msra.mxu0 %v518
    %642 = vmatprep.subr.mxu0 0.0
    %643 = vmatpush1.msra.mxu0 %v517
    %644 = vmatprep.subr.mxu0 0.0
    %645 = vmatpush2.msra.mxu0 0.0
    %646 = vmatprep.subr.mxu0 0.0
    %647 = vmatpush2.msra.mxu0 0.0
    %648 = vmatprep.subr.mxu0 0.0
    %649 = vmatpush2.msra.mxu0 0.0
    %650 = vmatprep.subr.mxu0 0.0
    %651 = vmatpush2.msra.mxu0 0.0
    %652 = vmatprep.subr.mxu0 0.0
    %653 = vmatpush2.msra.mxu0 0.0
    %654 = vmatprep.subr.mxu0 0.0
    %655 = vmatpush2.msra.mxu0 0.0
    %656 = vmatprep.subr.mxu0 0.0
    %657 = vmatpush2.msra.mxu0 0.0
    %658 = vmatprep.subr.mxu0 0.0
    %659 = vmatpush2.msra.mxu0 0.0
    %660 = vmatprep.subr.mxu0 0.0
    %661 = vmatpush2.msra.mxu0 0.0
    %662 = vmatprep.subr.mxu0 0.0
    %663 = vmatpush2.msra.mxu0 0.0
    %664 = vmatprep.subr.mxu0 0.0
    %665 = vmatpush2.msra.mxu0 0.0
    %666 = vmatprep.subr.mxu0 0.0
    %667 = vmatpush2.msra.mxu0 0.0
    %668 = vmatprep.subr.mxu0 0.0
    %669 = vmatpush2.msra.mxu0 0.0
    %670 = vmatprep.subr.mxu0 0.0
    %671 = vmatpush2.msra.mxu0 0.0
    %672 = vmatprep.subr.mxu0 0.0
    %673 = vmatpush2.msra.mxu0 0.0
    %674 = vmatprep.subr.mxu0 0.0
    %675 = vmatpush2.msra.mxu0 0.0
    %676 = vmatprep.mubr.f32.mxu0 0.0
    %677 = vmatmul.mubr.f32.gmra.mxu0 %v607
    %v678 = vpop.f32.mrf.mxu0
    %v679 = vadd.f32 %v598, %v678
    %v680 = vpop.f32.mrf.mxu0
    %681 = vmatprep.mubr.f32.mxu0 0.0
    %682 = vmatmul.mubr.f32.gmra.mxu0 %v610
    %v683 = vpop.f32.mrf.mxu0
    %v684 = vadd.f32 %v603, %v683
    %v685 = vpop.f32.mrf.mxu0
    %686 = vdwg.mxu0
    %v687 = vadd.f32 %v18, %v679
    %v688 = vadd.f32 %v19, %v684
    %v689 = vsel %vm20, %v687, 0.0
    %690 = vadd.xlane.f32.xlu0 %v689
    %v691 = vpop.xlane.xlu0 %690
    %v692 = vsel %vm20, %v688, 0.0
    %693 = vadd.xlane.f32.xlu0 %v692
    %v694 = vpop.xlane.xlu0 %693
    %v695 = vmul.f32 %v687, %v687
    %v696 = vmul.f32 %v688, %v688
    %v697 = vsel %vm20, %v695, 0.0
    %698 = vadd.xlane.f32.xlu0 %v697
    %v699 = vpop.xlane.xlu0 %698
    %v700 = vsel %vm20, %v696, 0.0
    %701 = vadd.xlane.f32.xlu0 %v700
    %v702 = vpop.xlane.xlu0 %701
    %v703 = vmul.f32 %v691, 0.03125
    %v704 = vmul.f32 %v694, 0.03125
    %v705 = vmul.f32 %v699, 0.03125
    %v706 = vmul.f32 %v702, 0.03125
    %v707 = vmul.f32 %v703, %v703
    %v708 = vmul.f32 %v704, %v704
    %v709 = vsub.f32 %v705, %v707
    %v710 = vsub.f32 %v706, %v708
    %v711 = vsub.f32 %v687, %v703
    %v712 = vsub.f32 %v688, %v704
    %v713 = vadd.f32 %v709, 1e-05
    %v714 = vadd.f32 %v710, 1e-05
    %v715 = vrsqrt.pop %v713
    %v716 = vrsqrt.pop %v714
    %v717 = vmul.f32 %v711, %v715
    %v718 = vmul.f32 %v712, %v716
    %v719 = vld [vmem:[%s2] sm:$0xff]
    %v720 = vld [vmem:[%s2 + $0x8] sm:$0xff]
    %v721 = vld [vmem:[%s2 + $0x10] sm:$0xff]
    %v722 = vld [vmem:[%s2 + $0x18] sm:$0xff]
    %v723 = vld [vmem:[%s2 + $0x40] sm:$0x1]
    %v724 = vlaneseq
    %v725 = vshrl.u32 %v724, 7
    %v726 = vsub.s32 0, %v725
    %v727 = vrot.slane %v723, %v726
    %v729 = vsel %vm20, %v717, 0
    %v732 = vsel %vm20, %v718, 0
    %734 = vmatprep.subr.mxu0 0.0
    %735 = vmatpush1.msra.mxu0 0.0
    %736 = vmatprep.subr.mxu0 0.0
    %737 = vmatpush1.msra.mxu0 0.0
    %738 = vmatprep.subr.mxu0 0.0
    %739 = vmatpush1.msra.mxu0 0.0
    %740 = vmatprep.subr.mxu0 0.0
    %741 = vmatpush1.msra.mxu0 0.0
    %742 = vmatprep.subr.mxu0 0.0
    %743 = vmatpush1.msra.mxu0 0.0
    %744 = vmatprep.subr.mxu0 0.0
    %745 = vmatpush1.msra.mxu0 0.0
    %746 = vmatprep.subr.mxu0 0.0
    %747 = vmatpush1.msra.mxu0 0.0
    %748 = vmatprep.subr.mxu0 0.0
    %749 = vmatpush1.msra.mxu0 0.0
    %750 = vmatprep.subr.mxu0 0.0
    %751 = vmatpush1.msra.mxu0 0.0
    %752 = vmatprep.subr.mxu0 0.0
    %753 = vmatpush1.msra.mxu0 0.0
    %754 = vmatprep.subr.mxu0 0.0
    %755 = vmatpush1.msra.mxu0 0.0
    %756 = vmatprep.subr.mxu0 0.0
    %757 = vmatpush1.msra.mxu0 0.0
    %758 = vmatprep.subr.mxu0 0.0
    %759 = vmatpush1.msra.mxu0 %v722
    %760 = vmatprep.subr.mxu0 0.0
    %761 = vmatpush1.msra.mxu0 %v721
    %762 = vmatprep.subr.mxu0 0.0
    %763 = vmatpush1.msra.mxu0 %v720
    %764 = vmatprep.subr.mxu0 0.0
    %765 = vmatpush1.msra.mxu0 %v719
    %766 = vmatprep.subr.mxu0 0.0
    %767 = vmatpush2.msra.mxu0 0.0
    %768 = vmatprep.subr.mxu0 0.0
    %769 = vmatpush2.msra.mxu0 0.0
    %770 = vmatprep.subr.mxu0 0.0
    %771 = vmatpush2.msra.mxu0 0.0
    %772 = vmatprep.subr.mxu0 0.0
    %773 = vmatpush2.msra.mxu0 0.0
    %774 = vmatprep.subr.mxu0 0.0
    %775 = vmatpush2.msra.mxu0 0.0
    %776 = vmatprep.subr.mxu0 0.0
    %777 = vmatpush2.msra.mxu0 0.0
    %778 = vmatprep.subr.mxu0 0.0
    %779 = vmatpush2.msra.mxu0 0.0
    %780 = vmatprep.subr.mxu0 0.0
    %781 = vmatpush2.msra.mxu0 0.0
    %782 = vmatprep.subr.mxu0 0.0
    %783 = vmatpush2.msra.mxu0 0.0
    %784 = vmatprep.subr.mxu0 0.0
    %785 = vmatpush2.msra.mxu0 0.0
    %786 = vmatprep.subr.mxu0 0.0
    %787 = vmatpush2.msra.mxu0 0.0
    %788 = vmatprep.subr.mxu0 0.0
    %789 = vmatpush2.msra.mxu0 0.0
    %790 = vmatprep.subr.mxu0 0.0
    %791 = vmatpush2.msra.mxu0 0.0
    %792 = vmatprep.subr.mxu0 0.0
    %793 = vmatpush2.msra.mxu0 0.0
    %794 = vmatprep.subr.mxu0 0.0
    %795 = vmatpush2.msra.mxu0 0.0
    %796 = vmatprep.subr.mxu0 0.0
    %797 = vmatpush2.msra.mxu0 0.0
    %798 = vmatprep.mubr.f32.mxu0 0.0
    %799 = vmatmul.mubr.f32.gmra.mxu0 %v729
    %v800 = vpop.f32.mrf.mxu0
    %v801 = vadd.f32 %v727, %v800
    %v802 = vpop.f32.mrf.mxu0
    %803 = vmatprep.mubr.f32.mxu0 0.0
    %804 = vmatmul.mubr.f32.gmra.mxu0 %v732
    %v805 = vpop.f32.mrf.mxu0
    %v806 = vadd.f32 %v727, %v805
    %v807 = vpop.f32.mrf.mxu0
    %808 = vdwg.mxu0
    %v809 = vmul.f32 %v801, %v801
    %v810 = vmul.f32 %v806, %v806
    %v811 = vmul.f32 %v801, %v809
    %v812 = vmul.f32 %v806, %v810
    %v813 = vmul.f32 %v811, 0.044715
    %v814 = vmul.f32 %v812, 0.044715
    %v815 = vadd.f32 %v801, %v813
    %v816 = vadd.f32 %v806, %v814
    %v817 = vmul.f32 %v815, 0.7978846
    %v818 = vmul.f32 %v816, 0.7978846
    %v819 = vtanh.pop %v817
    %v820 = vtanh.pop %v818
    %v821 = vadd.f32 %v819, 1.0
    %v822 = vadd.f32 %v820, 1.0
    %v823 = vmul.f32 %v821, 0.5
    %v824 = vmul.f32 %v822, 0.5
    %v825 = vmul.f32 %v801, %v823
    %v826 = vmul.f32 %v806, %v824
    %v827 = vld [vmem:[%s3 + $0x40] sm:$0xff]
    %v828 = vld [vmem:[%s3 + $0x48] sm:$0xff]
    %v829 = vld [vmem:[%s3 + $0x50] sm:$0xff]
    %v830 = vld [vmem:[%s3 + $0x58] sm:$0xff]
    %v831 = vld [vmem:[%s3 + $0x60] sm:$0xff]
    %v832 = vld [vmem:[%s3 + $0x68] sm:$0xff]
    %v833 = vld [vmem:[%s3 + $0x70] sm:$0xff]
    %v834 = vld [vmem:[%s3 + $0x78] sm:$0xff]
    %v835 = vld [vmem:[%s3 + $0x80] sm:$0xff]
    %v836 = vld [vmem:[%s3 + $0x88] sm:$0xff]
    %v837 = vld [vmem:[%s3 + $0x90] sm:$0xff]
    %v838 = vld [vmem:[%s3 + $0x98] sm:$0xff]
    %v839 = vld [vmem:[%s3 + $0xa0] sm:$0xff]
    %v840 = vld [vmem:[%s3 + $0xa8] sm:$0xff]
    %v841 = vld [vmem:[%s3 + $0xb0] sm:$0xff]
    %v842 = vld [vmem:[%s3 + $0xb8] sm:$0xff]
    %v843 = vld [vmem:[%s3 + $0xe0] sm:$0x1]
    %v844 = vlaneseq
    %v845 = vshrl.u32 %v844, 7
    %v846 = vsub.s32 0, %v845
    %v847 = vrot.slane %v843, %v846
    %848 = vmatprep.subr.mxu0 0.0
    %849 = vmatpush1.msra.mxu0 %v842
    %850 = vmatprep.subr.mxu0 0.0
    %851 = vmatpush1.msra.mxu0 %v841
    %852 = vmatprep.subr.mxu0 0.0
    %853 = vmatpush1.msra.mxu0 %v840
    %854 = vmatprep.subr.mxu0 0.0
    %855 = vmatpush1.msra.mxu0 %v839
    %856 = vmatprep.subr.mxu0 0.0
    %857 = vmatpush1.msra.mxu0 %v838
    %858 = vmatprep.subr.mxu0 0.0
    %859 = vmatpush1.msra.mxu0 %v837
    %860 = vmatprep.subr.mxu0 0.0
    %861 = vmatpush1.msra.mxu0 %v836
    %862 = vmatprep.subr.mxu0 0.0
    %863 = vmatpush1.msra.mxu0 %v835
    %864 = vmatprep.subr.mxu0 0.0
    %865 = vmatpush1.msra.mxu0 %v834
    %866 = vmatprep.subr.mxu0 0.0
    %867 = vmatpush1.msra.mxu0 %v833
    %868 = vmatprep.subr.mxu0 0.0
    %869 = vmatpush1.msra.mxu0 %v832
    %870 = vmatprep.subr.mxu0 0.0
    %871 = vmatpush1.msra.mxu0 %v831
    %872 = vmatprep.subr.mxu0 0.0
    %873 = vmatpush1.msra.mxu0 %v830
    %874 = vmatprep.subr.mxu0 0.0
    %875 = vmatpush1.msra.mxu0 %v829
    %876 = vmatprep.subr.mxu0 0.0
    %877 = vmatpush1.msra.mxu0 %v828
    %878 = vmatprep.subr.mxu0 0.0
    %879 = vmatpush1.msra.mxu0 %v827
    %880 = vmatprep.subr.mxu0 0.0
    %881 = vmatpush2.msra.mxu0 0.0
    %882 = vmatprep.subr.mxu0 0.0
    %883 = vmatpush2.msra.mxu0 0.0
    %884 = vmatprep.subr.mxu0 0.0
    %885 = vmatpush2.msra.mxu0 0.0
    %886 = vmatprep.subr.mxu0 0.0
    %887 = vmatpush2.msra.mxu0 0.0
    %888 = vmatprep.subr.mxu0 0.0
    %889 = vmatpush2.msra.mxu0 0.0
    %890 = vmatprep.subr.mxu0 0.0
    %891 = vmatpush2.msra.mxu0 0.0
    %892 = vmatprep.subr.mxu0 0.0
    %893 = vmatpush2.msra.mxu0 0.0
    %894 = vmatprep.subr.mxu0 0.0
    %895 = vmatpush2.msra.mxu0 0.0
    %896 = vmatprep.subr.mxu0 0.0
    %897 = vmatpush2.msra.mxu0 0.0
    %898 = vmatprep.subr.mxu0 0.0
    %899 = vmatpush2.msra.mxu0 0.0
    %900 = vmatprep.subr.mxu0 0.0
    %901 = vmatpush2.msra.mxu0 0.0
    %902 = vmatprep.subr.mxu0 0.0
    %903 = vmatpush2.msra.mxu0 0.0
    %904 = vmatprep.subr.mxu0 0.0
    %905 = vmatpush2.msra.mxu0 0.0
    %906 = vmatprep.subr.mxu0 0.0
    %907 = vmatpush2.msra.mxu0 0.0
    %908 = vmatprep.subr.mxu0 0.0
    %909 = vmatpush2.msra.mxu0 0.0
    %910 = vmatprep.subr.mxu0 0.0
    %911 = vmatpush2.msra.mxu0 0.0
    %912 = vmatprep.mubr.f32.mxu0 0.0
    %913 = vmatmul.mubr.f32.gmra.mxu0 %v825
    %v914 = vpop.f32.mrf.mxu0
    %v915 = vadd.f32 %v847, %v914
    %v916 = vpop.f32.mrf.mxu0
    %917 = vmatprep.mubr.f32.mxu0 0.0
    %918 = vmatmul.mubr.f32.gmra.mxu0 %v826
    %v919 = vpop.f32.mrf.mxu0
    %v920 = vadd.f32 %v847, %v919
    %v921 = vpop.f32.mrf.mxu0
    %922 = vdwg.mxu0
    %v923 = vadd.f32 %v687, %v915
    %v924 = vadd.f32 %v688, %v920
    %925 = vst.msk [vmem:[#allocation2] sm:$0xff] %vm20, %v923
    %926 = vst.msk [vmem:[#allocation2 + $0x8] sm:$0xff] %vm20, %v924
    // Predicated region
    $region18: #{tpu_custom_call.1} parent=1 // pred_check
      _
    $region19: #{tpu_custom_call.1} parent=1 // pred_check_branch
      %928 = sbr.rel (0) target = $region21
    $region20: #{tpu_custom_call.1} parent=1 // pred_region
      %s930 = ssub.s32 256, 256
      %931 = vsyncadd [#allocation3], %s930
      %s932 = sshll.u32 [#allocation2], 4
      %s933 = int_to_ptr.vmem [resolvable:$true] %s932
      %938 = dma.vmem_to_hbm [thread:$0]  %s933, 256, %s4, [#allocation3], 128, 128, 8
    $region21: #{tpu_custom_call.1} parent=1 // pred_fallthru
      _
    // Predicated region
    $region22: #{tpu_custom_call.1} parent=1 // pred_check
      _
    $region23: #{tpu_custom_call.1} parent=1 // pred_check_branch
      %940 = sbr.rel (0) target = $region25
    $region24: #{tpu_custom_call.1} parent=1 // pred_region
      %941 = dma.done [#allocation3], 256
    $region25: #{tpu_custom_call.1} parent=1 // pred_fallthru
      _
    %942 = vsyncpa [#allocation3], 1

</llo_original>
